<compile_context>
chip_gen: v6e
topology: v6e:2x2x1
jax: 0.10.0
libtpu: 0.0.40
codegen_flags: <defaults>
</compile_context>

<pallas_src>
import jax
import jax.numpy as jnp
from jax.experimental import pallas as pl
from jax.experimental.pallas import tpu as pltpu

_MIB = 1024 * 1024


def _round_up(x, m):
    return ((x + m - 1) // m) * m


def _vmem_caps():
    """Per-generation (tile_budget_bytes, vmem_limit_bytes)."""
    cap = 128 * _MIB
    try:
        info = pltpu.get_tpu_info()
        cap = int(getattr(info, "vmem_capacity_bytes", cap) or cap)
    except Exception:
        pass
    if cap >= 128 * _MIB:          # v5e / v6e: 128 MiB physical VMEM
        limit = 100 * _MIB
    else:                          # v7x: 64 MiB per TensorCore
        limit = 48 * _MIB
    budget = limit - 8 * _MIB      # headroom for Mosaic internal scratch
    return budget, limit


def _kernel_single_k(x_ref, w_ref, b_ref, o_ref):
    # x: (tm, tk)  w: (tk, tn) pre-transposed  b: (1, tn)  o: (tm, tn)
    prod = jnp.dot(x_ref[...], w_ref[...], preferred_element_type=jnp.float32)
    o_ref[...] = jnp.tanh(prod + b_ref[...]).astype(o_ref.dtype)


def _kernel_multi_k(x_ref, w_ref, b_ref, o_ref, acc_ref):
    # x: (tm, tk)  w: (tk, tn)  b: (1, tn)  o/acc: (tm, tn).  Grid K axis last.
    k = pl.program_id(2)
    nk = pl.num_programs(2)
    prod = jnp.dot(x_ref[...], w_ref[...], preferred_element_type=jnp.float32)

    @pl.when(k == 0)
    def _():                      # first step writes (no zero-init pass)
        acc_ref[...] = prod

    @pl.when((k > 0) & (k < nk - 1))
    def _():
        acc_ref[...] += prod

    @pl.when(k == nk - 1)
    def _():                      # fuse last partial + bias + tanh into the store
        o_ref[...] = jnp.tanh(acc_ref[...] + prod + b_ref[...]).astype(o_ref.dtype)


def make_nonlinear_transformation(weight, bias, *, compute_dtype=jnp.bfloat16,
                                  tm_max=512, tn_max=2048, tk_max=2048):
    """One-time parameter prep.  Returns apply(x) = tanh(x @ weight.T + bias)."""
    d_out, d_in = weight.shape
    if compute_dtype is None:
        compute_dtype = weight.dtype
    w_bytes = jnp.dtype(compute_dtype).itemsize
    m_align = 16 if w_bytes < 4 else 8

    budget, vmem_limit = _vmem_caps()

    # Lane-dense (multiple-of-128) N / K tiles.
    tn = min(_round_up(tn_max, 128), _round_up(d_out, 128))
    tk = min(_round_up(tk_max, 128), _round_up(d_in, 128))
    Np = _round_up(d_out, tn)

    # v7x megacore: keep >= 2 N tiles so both TensorCores get work even when
    # the batch fits a single M tile (harmless on 1-TC v5e/v6e).
    if Np // tn == 1 and Np >= 256 and (Np // 2) % 128 == 0:
        tn = Np // 2

    def footprint(tm_, tn_, tk_, wbuf_):
        return (2 * tm_ * tk_ * w_bytes       # x tiles (double-buffered)
                + wbuf_ * tk_ * tn_ * w_bytes  # weight tiles
                + 2 * tm_ * tn_ * 4            # output tiles (<= f32)
                + tm_ * tn_ * 4                # f32 accumulator scratch
                + 2 * tn_ * 4)                 # bias tiles

    # Fit the per-generation VMEM budget: first drop extra weight buffering,
    # then shrink K, then N (never M / output-N first).
    wbuf = 3
    while footprint(_round_up(tm_max, m_align), tn, tk, wbuf) > budget:
        if wbuf > 2:
            wbuf = 2
        elif tk > 512 and (tk // 2) % 128 == 0:
            tk //= 2
        elif tn > 512 and (tn // 2) % 128 == 0:
            tn //= 2
        else:
            break

    Np = _round_up(d_out, tn)
    Kp = _round_up(d_in, tk)
    grid_n = Np // tn
    grid_k = Kp // tk

    # --- One-time (init) parameter prep: transpose -> (K, N), cast, pad. ---
    w_t = weight.T.astype(compute_dtype)
    if (Kp, Np) != (d_in, d_out):
        w_t = jnp.pad(w_t, ((0, Kp - d_in), (0, Np - d_out)))
    b2d = bias.astype(jnp.float32).reshape(1, d_out)
    if Np != d_out:
        b2d = jnp.pad(b2d, ((0, 0), (0, Np - d_out)))
    w_t = jax.block_until_ready(w_t)
    b2d = jax.block_until_ready(b2d)

    use_buffered = (wbuf > 2) and hasattr(pl, "Buffered")

    def apply(x):
        B, d_in_x = x.shape
        assert d_in_x == d_in, "input feature size mismatch"
        out_dtype = x.dtype

        xk = x.astype(compute_dtype)
        tm = min(_round_up(tm_max, m_align), _round_up(B, m_align))
        Mp = _round_up(B, tm)
        if (Mp, Kp) != (B, d_in):
            xk = jnp.pad(xk, ((0, Mp - B), (0, Kp - d_in)))
        grid_m = Mp // tm

        out_itemsize = jnp.dtype(out_dtype).itemsize
        cost = pl.CostEstimate(
            flops=int(2 * Mp * Np * Kp),
            transcendentals=int(Mp * Np),
            bytes_accessed=int(Mp * Kp * w_bytes * grid_n
                               + Kp * Np * w_bytes * grid_m
                               + Np * 4 + Mp * Np * out_itemsize),
        )

        total_steps = grid_m * grid_n * grid_k
        w_kwargs = {}
        if use_buffered and total_steps >= wbuf:
            w_kwargs["pipeline_mode"] = pl.Buffered(wbuf)

        if grid_k == 1:
            grid = (grid_m, grid_n)
            in_specs = [
                pl.BlockSpec((tm, tk), lambda i, j: (i, 0)),            # x
                pl.BlockSpec((tk, tn), lambda i, j: (0, j), **w_kwargs),  # W^T
                pl.BlockSpec((1, tn), lambda i, j: (0, j)),             # bias
            ]
            out_specs = pl.BlockSpec((tm, tn), lambda i, j: (i, j))
            kernel = _kernel_single_k
            scratch = []
            dims = ("parallel", "parallel")
        else:
            grid = (grid_m, grid_n, grid_k)                 # reduction last
            in_specs = [
                pl.BlockSpec((tm, tk), lambda i, j, k: (i, k)),
                pl.BlockSpec((tk, tn), lambda i, j, k: (k, j), **w_kwargs),
                pl.BlockSpec((1, tn), lambda i, j, k: (0, j)),
            ]
            out_specs = pl.BlockSpec((tm, tn), lambda i, j, k: (i, j))
            kernel = _kernel_multi_k
            scratch = [pltpu.VMEM((tm, tn), jnp.float32)]
            dims = ("parallel", "parallel", "arbitrary")

        out = pl.pallas_call(
            kernel,
            out_shape=jax.ShapeDtypeStruct((Mp, Np), out_dtype),
            grid=grid,
            in_specs=in_specs,
            out_specs=out_specs,
            scratch_shapes=scratch,
            compiler_params=pltpu.CompilerParams(
                dimension_semantics=dims,
                vmem_limit_bytes=vmem_limit,
            ),
            cost_estimate=cost,
        )(xk, w_t, b2d)

        if (Mp, Np) != (B, d_out):
            out = out[:B, :d_out]
        return out

    return apply


def nonlinear_transformation(x, weight, bias, **kwargs):
    """Convenience: y = tanh(x @ weight.T + bias) (prep + call in one go)."""
    return make_nonlinear_transformation(weight, bias, **kwargs)(x)


if __name__ == "__main__":
    key = jax.random.PRNGKey(0)

    def make_inputs(key, batch, input_size, output_size):
        kx, kw, kb = jax.random.split(key, 3)
        x = jax.random.normal(kx, (batch, input_size), dtype=jnp.float32)
        # nn.Linear default init: uniform(-1/sqrt(in), 1/sqrt(in))
        bound = 1.0 / (input_size ** 0.5)
        w = jax.random.uniform(kw, (output_size, input_size),
                               minval=-bound, maxval=bound, dtype=jnp.float32)
        b = jax.random.uniform(kb, (output_size,),
                               minval=-bound, maxval=bound, dtype=jnp.float32)
        return x, w, b

    def ref_fn(x, w, b):
        return jnp.tanh(jnp.dot(x, w.T, precision=jax.lax.Precision.HIGHEST) + b)

    k1, k2 = jax.random.split(key)

    # Test 1: small probe shape (8 x 32 -> 32), default bf16 compute path.
    x, w, b = make_inputs(k1, batch=8, input_size=32, output_size=32)
    out = jax.block_until_ready(nonlinear_transformation(x, w, b))
    ref = ref_fn(x, w, b)
    assert out.shape == ref.shape
    assert jnp.allclose(out, ref, atol=2e-2), "bf16 small-shape mismatch"

    # Test 2: exact f32 path, small tiles forced to exercise the multi-step K
    # reduction, multi-N grid, padding, and the Buffered weight pipeline.
    x2, w2, b2 = make_inputs(k2, batch=64, input_size=1024, output_size=256)
    out2 = jax.block_until_ready(
        nonlinear_transformation(x2, w2, b2, compute_dtype=jnp.float32,
                                 tm_max=64, tn_max=128, tk_max=256))
    ref2 = ref_fn(x2, w2, b2)
    assert out2.shape == ref2.shape
    assert jnp.allclose(out2, ref2, atol=1e-4, rtol=1e-4), "f32 multi-K mismatch"

    # Test 3: default (bf16, large-tile) path on the same shape; exercises the
    # single-K kernel, init-time weight prep reuse, and the N megacore split.
    apply3 = make_nonlinear_transformation(w2, b2)   # one-time param prep
    out3 = jax.block_until_ready(apply3(x2))
    assert out3.shape == ref2.shape
    assert jnp.allclose(out3, ref2, atol=2e-2), "bf16 default-path mismatch"

    print("KERNEL_OK")
</pallas_src>

<mosaic_0001>
module attributes {stable_mosaic.version = 11 : i64} {
  func.func @_kernel_single_k(%arg0: i32, %arg1: i32, %arg2: memref<16x128xbf16, #tpu.memory_space<vmem>>, %arg3: memref<128x128xbf16, #tpu.memory_space<vmem>>, %arg4: memref<1x128xf32, #tpu.memory_space<vmem>>, %arg5: memref<16x128xf32, #tpu.memory_space<vmem>>) attributes {dimension_semantics = [#tpu.dimension_semantics<parallel>, #tpu.dimension_semantics<parallel>], iteration_bounds = array<i64: 1, 1>, scalar_prefetch = 0 : i64, scratch_operands = 0 : i64, tpu.core_type = #tpu.core_type<tc>, window_params = [{transform_indices = @transform_0, window_bounds = array<i64: 16, 128>}, {transform_indices = @transform_1, window_bounds = array<i64: 128, 128>}, {transform_indices = @transform_2, window_bounds = array<i64: 1, 128>}, {transform_indices = @transform_3, window_bounds = array<i64: 16, 128>}]} {
    %c0 = arith.constant 0 : index
    %c0_0 = arith.constant 0 : index
    %0 = vector.load %arg2[%c0, %c0_0] : memref<16x128xbf16, #tpu.memory_space<vmem>>, vector<16x128xbf16>
    %c0_1 = arith.constant 0 : index
    %c0_2 = arith.constant 0 : index
    %1 = vector.load %arg3[%c0_1, %c0_2] : memref<128x128xbf16, #tpu.memory_space<vmem>>, vector<128x128xbf16>
    %cst = arith.constant dense<0.000000e+00> : vector<16x128xf32>
    %2 = tpu.matmul %0, %1, %cst {dimension_numbers = #tpu.dot_dimension_numbers<[1], [0], [0], [1], [0, 0, 1, 1], [], []>} : vector<16x128xbf16>, vector<128x128xbf16>, vector<16x128xf32> -> vector<16x128xf32>
    %c0_3 = arith.constant 0 : index
    %c0_4 = arith.constant 0 : index
    %3 = vector.load %arg4[%c0_3, %c0_4] : memref<1x128xf32, #tpu.memory_space<vmem>>, vector<1x128xf32>
    %4 = vector.broadcast %3 : vector<1x128xf32> to vector<16x128xf32>
    %5 = arith.addf %2, %4 : vector<16x128xf32>
    %6 = math.tanh %5 : vector<16x128xf32>
    %c0_5 = arith.constant 0 : index
    %c0_6 = arith.constant 0 : index
    %7 = vector.load %arg5[%c0_5, %c0_6] : memref<16x128xf32, #tpu.memory_space<vmem>>, vector<16x128xf32>
    tpu.vector_store %arg5[%c0_5, %c0_6], %6 {strides = array<i32>} : memref<16x128xf32, #tpu.memory_space<vmem>>, vector<16x128xf32>,
    return
  }
  func.func @transform_0(%arg0: i32, %arg1: i32) -> (i32, i32) {
    %c0_i32 = arith.constant 0 : i32
    %c0_i32_0 = arith.constant 0 : i32
    return %arg0, %c0_i32 : i32, i32
  }
  func.func @transform_1(%arg0: i32, %arg1: i32) -> (i32, i32) {
    %c0_i32 = arith.constant 0 : i32
    %c0_i32_0 = arith.constant 0 : i32
    return %c0_i32, %arg1 : i32, i32
  }
  func.func @transform_2(%arg0: i32, %arg1: i32) -> (i32, i32) {
    %c0_i32 = arith.constant 0 : i32
    %c0_i32_0 = arith.constant 0 : i32
    return %c0_i32, %arg1 : i32, i32
  }
  func.func @transform_3(%arg0: i32, %arg1: i32) -> (i32, i32) {
    %c0_i32 = arith.constant 0 : i32
    return %arg0, %arg1 : i32, i32
  }
}

</mosaic_0001>

<llo_original>
// kernel: tpu_custom_call.1
$region0: #{tpu_custom_call.1}
  #allocation0 [shape = 'u32[]', space=smem, size = 0x4, offset = 0x4, fixed_abs, tag = 'smem constant byte address 0x4 - core index']
  #allocation1 [shape = 'u32[144,128]{1,0:T(1,128)}', space=vmem, size = 0x12000, scoped, tag = 'internal scratch']
  %s0 = inlined_call_operand.hbm [shape: bf16[16,128], index: 0, kind: input, shape index: {}]
  %s1 = inlined_call_operand.hbm [shape: bf16[128,128], index: 1, kind: input, shape index: {}]
  %s2 = inlined_call_operand.vmem [shape: f32[1,128], index: 2, kind: input, shape index: {}]
  %s3 = inlined_call_operand.hbm [shape: f32[16,128], index: 3, kind: output, shape index: {}]
  %s4 = sld [smem:[#allocation0]]
  $region30: #{tpu_custom_call.1} parent=0
    _
  %s6 = ssub.s32 1, %s4
  %s7 = scalar_select 0, %s6, %s4
  $region1: #{tpu_custom_call.1} parent=0
    #allocation2 [shape = 'u8[4096]{0}', space=vmem, size = 0x1000, scoped, tag = 'input window, operand 0, single buffered']
    #allocation3 [shape = 's32[1]{0}', space=sflag, size = 0x4, scoped, tag = 'scoped memory for tpu_custom_call.1']
    #allocation4 [shape = 's32[1]{0}', space=sflag, size = 0x4, scoped, tag = 'scoped memory for tpu_custom_call.1']
    #allocation5 [shape = 'u8[32768]{0}', space=vmem, size = 0x8000, scoped, tag = 'input window, operand 1, single buffered']
    #allocation6 [shape = 's32[1]{0}', space=sflag, size = 0x4, scoped, tag = 'scoped memory for tpu_custom_call.1']
    #allocation7 [shape = 'u8[8192]{0}', space=vmem, size = 0x2000, scoped, tag = 'output window, operand 0, single buffered']
    %8 = vsyncpa [#allocation3], 0
    %9 = vsyncpa [#allocation6], 0
    %10 = vsyncpa [#allocation4], 0
    // Predicated region
    $region2: #{tpu_custom_call.1} parent=1 // pred_check
      _
    $region3: #{tpu_custom_call.1} parent=1 // pred_check_branch
      %12 = sbr.rel (0) target = $region5
    $region4: #{tpu_custom_call.1} parent=1 // pred_region
      %s14 = ssub.s32 128, 128
      %15 = vsyncadd [#allocation3], %s14
      %s16 = sshll.u32 [#allocation2], 4
      %s17 = int_to_ptr.vmem [resolvable:$true] %s16
      %22 = dma.hbm_to_vmem [thread:$0]  %s0, 128, %s17, [#allocation3], 64, 64, 4
    $region5: #{tpu_custom_call.1} parent=1 // pred_fallthru
      _
    // Predicated region
    $region6: #{tpu_custom_call.1} parent=1 // pred_check
      _
    $region7: #{tpu_custom_call.1} parent=1 // pred_check_branch
      %24 = sbr.rel (0) target = $region9
    $region8: #{tpu_custom_call.1} parent=1 // pred_region
      %s26 = ssub.s32 1024, 1024
      %27 = vsyncadd [#allocation6], %s26
      %s28 = sshll.u32 [#allocation5], 4
      %s29 = int_to_ptr.vmem [resolvable:$true] %s28
      %34 = dma.hbm_to_vmem [thread:$0]  %s1, 1024, %s29, [#allocation6], 64, 64, 4
    $region9: #{tpu_custom_call.1} parent=1 // pred_fallthru
      _
    // Predicated region
    $region10: #{tpu_custom_call.1} parent=1 // pred_check
      _
    $region11: #{tpu_custom_call.1} parent=1 // pred_check_branch
      %36 = sbr.rel (0) target = $region13
    $region12: #{tpu_custom_call.1} parent=1 // pred_region
      _
    $region13: #{tpu_custom_call.1} parent=1 // pred_fallthru
      _
    // Predicated region
    $region14: #{tpu_custom_call.1} parent=1 // pred_check
      _
    $region15: #{tpu_custom_call.1} parent=1 // pred_check_branch
      %38 = sbr.rel (0) target = $region17
    $region16: #{tpu_custom_call.1} parent=1 // pred_region
      %39 = dma.done [#allocation3], 128
    $region17: #{tpu_custom_call.1} parent=1 // pred_fallthru
      _
    // Predicated region
    $region18: #{tpu_custom_call.1} parent=1 // pred_check
      _
    $region19: #{tpu_custom_call.1} parent=1 // pred_check_branch
      %41 = sbr.rel (0) target = $region21
    $region20: #{tpu_custom_call.1} parent=1 // pred_region
      %42 = dma.done [#allocation6], 1024
    $region21: #{tpu_custom_call.1} parent=1 // pred_fallthru
      _
    %v44 = vld [vmem:[#allocation2] sm:$0xf]
    %v45 = vld [vmem:[#allocation2 + $0x4] sm:$0xf]
    %v46 = vld [vmem:[#allocation5] sm:$0xf]
    %v47 = vld [vmem:[#allocation5 + $0x4] sm:$0xf]
    %v48 = vld [vmem:[#allocation5 + $0x8] sm:$0xf]
    %v49 = vld [vmem:[#allocation5 + $0xc] sm:$0xf]
    %v50 = vld [vmem:[#allocation5 + $0x10] sm:$0xf]
    %v51 = vld [vmem:[#allocation5 + $0x14] sm:$0xf]
    %v52 = vld [vmem:[#allocation5 + $0x18] sm:$0xf]
    %v53 = vld [vmem:[#allocation5 + $0x1c] sm:$0xf]
    %v54 = vld [vmem:[#allocation5 + $0x20] sm:$0xf]
    %v55 = vld [vmem:[#allocation5 + $0x24] sm:$0xf]
    %v56 = vld [vmem:[#allocation5 + $0x28] sm:$0xf]
    %v57 = vld [vmem:[#allocation5 + $0x2c] sm:$0xf]
    %v58 = vld [vmem:[#allocation5 + $0x30] sm:$0xf]
    %v59 = vld [vmem:[#allocation5 + $0x34] sm:$0xf]
    %v60 = vld [vmem:[#allocation5 + $0x38] sm:$0xf]
    %v61 = vld [vmem:[#allocation5 + $0x3c] sm:$0xf]
    %v62 = vld [vmem:[%s2] sm:$0x1]
    %v64 = vlaneseq
    %v65 = vshrl.u32 %v64, 7
    %v66 = vsub.s32 0, %v65
    %v67 = vrot.slane %v62, %v66
    %v71 = vunpack.c.l.b16 %v44
    %v72 = vunpack.c.l.b16 %v45
    %v73 = vpack.c.b16 %v72, %v71
    %v91 = vunpack.c.l.b16 %v46
    %v92 = vunpack.c.l.b16 %v47
    %v93 = vunpack.c.l.b16 %v48
    %v94 = vunpack.c.l.b16 %v49
    %v95 = vunpack.c.l.b16 %v50
    %v96 = vunpack.c.l.b16 %v51
    %v97 = vunpack.c.l.b16 %v52
    %v98 = vunpack.c.l.b16 %v53
    %v99 = vunpack.c.l.b16 %v54
    %v100 = vunpack.c.l.b16 %v55
    %v101 = vunpack.c.l.b16 %v56
    %v102 = vunpack.c.l.b16 %v57
    %v103 = vunpack.c.l.b16 %v58
    %v104 = vunpack.c.l.b16 %v59
    %v105 = vunpack.c.l.b16 %v60
    %v106 = vunpack.c.l.b16 %v61
    %v107 = vpack.c.b16 %v92, %v91
    %v108 = vpack.c.b16 %v94, %v93
    %v109 = vpack.c.b16 %v96, %v95
    %v110 = vpack.c.b16 %v98, %v97
    %v111 = vpack.c.b16 %v100, %v99
    %v112 = vpack.c.b16 %v102, %v101
    %v113 = vpack.c.b16 %v104, %v103
    %v114 = vpack.c.b16 %v106, %v105
    %123 = vmatprep.subr.bf16.mxu0 0
    %124 = vmatpush1.bf16.msra.mxu0 %v114
    %125 = vmatprep.subr.bf16.mxu0 0
    %126 = vmatpush1.bf16.msra.mxu0 %v113
    %127 = vmatprep.subr.bf16.mxu0 0
    %128 = vmatpush1.bf16.msra.mxu0 %v112
    %129 = vmatprep.subr.bf16.mxu0 0
    %130 = vmatpush1.bf16.msra.mxu0 %v111
    %131 = vmatprep.subr.bf16.mxu0 0
    %132 = vmatpush1.bf16.msra.mxu0 %v110
    %133 = vmatprep.subr.bf16.mxu0 0
    %134 = vmatpush1.bf16.msra.mxu0 %v109
    %135 = vmatprep.subr.bf16.mxu0 0
    %136 = vmatpush1.bf16.msra.mxu0 %v108
    %137 = vmatprep.subr.bf16.mxu0 0
    %138 = vmatpush1.bf16.msra.mxu0 %v107
    %139 = vmatprep.subr.bf16.mxu0 0
    %140 = vmatpush2.bf16.msra.mxu0 0
    %141 = vmatprep.subr.bf16.mxu0 0
    %142 = vmatpush2.bf16.msra.mxu0 0
    %143 = vmatprep.subr.bf16.mxu0 0
    %144 = vmatpush2.bf16.msra.mxu0 0
    %145 = vmatprep.subr.bf16.mxu0 0
    %146 = vmatpush2.bf16.msra.mxu0 0
    %147 = vmatprep.subr.bf16.mxu0 0
    %148 = vmatpush2.bf16.msra.mxu0 0
    %149 = vmatprep.subr.bf16.mxu0 0
    %150 = vmatpush2.bf16.msra.mxu0 0
    %151 = vmatprep.subr.bf16.mxu0 0
    %152 = vmatpush2.bf16.msra.mxu0 0
    %153 = vmatprep.subr.bf16.mxu0 0
    %154 = vmatpush2.bf16.msra.mxu0 0
    %155 = vmatprep.mubr.bf16.mxu0 0
    %156 = vmatmul.mubr.bf16.gmra.mxu0 %v73
    %v157 = vpop.f32.mrf.mxu0
    %v158 = vadd.f32 %v67, %v157
    %v159 = vpop.f32.mrf.mxu0
    %v160 = vpop.f32.mrf.mxu0
    %v161 = vadd.f32 %v67, %v160
    %v162 = vpop.f32.mrf.mxu0
    %163 = vdwg.mxu0
    %v164 = vtanh.pop %v158
    %v165 = vtanh.pop %v161
    %166 = vst [vmem:[#allocation7] sm:$0xff] %v164
    %167 = vst [vmem:[#allocation7 + $0x8] sm:$0xff] %v165
    // Predicated region
    $region22: #{tpu_custom_call.1} parent=1 // pred_check
      _
    $region23: #{tpu_custom_call.1} parent=1 // pred_check_branch
      %169 = sbr.rel (0) target = $region25
    $region24: #{tpu_custom_call.1} parent=1 // pred_region
      %s171 = ssub.s32 256, 256
      %172 = vsyncadd [#allocation4], %s171
      %s173 = sshll.u32 [#allocation7], 4
      %s174 = int_to_ptr.vmem [resolvable:$true] %s173
      %179 = dma.vmem_to_hbm [thread:$0]  %s174, 256, %s3, [#allocation4], 128, 128, 8
    $region25: #{tpu_custom_call.1} parent=1 // pred_fallthru
      _
    // Predicated region
    $region26: #{tpu_custom_call.1} parent=1 // pred_check
      _
    $region27: #{tpu_custom_call.1} parent=1 // pred_check_branch
      %181 = sbr.rel (0) target = $region29
    $region28: #{tpu_custom_call.1} parent=1 // pred_region
      %182 = dma.done [#allocation4], 256
    $region29: #{tpu_custom_call.1} parent=1 // pred_fallthru
      _
    %183 = vsyncpa [#allocation3], 1
    %184 = vsyncpa [#allocation6], 1
    %185 = vsyncpa [#allocation4], 1

</llo_original>
